<compile_context>
chip_gen: v6e
topology: v6e:2x2x1
jax: 0.10.0
libtpu: 0.0.40
codegen_flags: <defaults>
</compile_context>

<pallas_src>
import jax
import jax.numpy as jnp
from jax.experimental import pallas as pl
from jax.experimental.pallas import tpu as pltpu

D_IN = 257
H1 = 512
H2 = 256
D_OUT = 257


def _mlp_kernel(x_ref, w1_ref, b1_ref, w2_ref, b2_ref, w3_ref, b3_ref, o_ref):
    # fc1 + relu  (bf16 operands into the MXU, f32 accumulate, f32 bias/ReLU)
    x_bf16 = x_ref[...].astype(jnp.bfloat16)
    h1 = jnp.dot(x_bf16, w1_ref[...], preferred_element_type=jnp.float32)
    h1 = jnp.maximum(h1 + b1_ref[...], 0.0)
    # fc2 + relu
    h2 = jnp.dot(h1.astype(jnp.bfloat16), w2_ref[...],
                 preferred_element_type=jnp.float32)
    h2 = jnp.maximum(h2 + b2_ref[...], 0.0)
    # fc3 (no activation)
    out = jnp.dot(h2.astype(jnp.bfloat16), w3_ref[...],
                  preferred_element_type=jnp.float32) + b3_ref[...]
    o_ref[...] = out.astype(o_ref.dtype)


def _round_up(v, m):
    return ((v + m - 1) // m) * m


def three_layer_net(x, w1, b1, w2, b2, w3, b3):
    """x: [B, 257] f32.  Weights are [in, out] f32, biases [1, out] f32.  Returns [B, 257] f32."""
    B = x.shape[0]

    # Weights to bf16 once (tiny, one-time); biases stay f32 for the f32 accumulator adds.
    w1b = w1.astype(jnp.bfloat16)
    w2b = w2.astype(jnp.bfloat16)
    w3b = w3.astype(jnp.bfloat16)

    # --- batch tile: <= 512 rows, multiple of 8, and >= 2 grid steps whenever B > 8 ---
    n_target = max(2, pl.cdiv(B, 512))
    TB = min(_round_up(pl.cdiv(B, n_target), 8), _round_up(B, 8))
    TB = max(TB, 8)
    n_blocks = pl.cdiv(B, TB)          # ragged last block handled by Pallas (no row pad)

    def const(shape):
        # Weights/biases: constant index_map -> DMA'd once, stay VMEM-resident.
        # Single-buffered: double-buffering a constant block is wasted VMEM.
        return pl.BlockSpec(shape, lambda i: tuple(0 for _ in shape),
                            pipeline_mode=pl.Buffered(1))

    out = pl.pallas_call(
        _mlp_kernel,
        out_shape=jax.ShapeDtypeStruct((B, D_OUT), x.dtype),
        grid=(n_blocks,),
        in_specs=[
            pl.BlockSpec((TB, D_IN), lambda i: (i, 0)),   # x streams per batch tile (f32)
            const((D_IN, H1)), const((1, H1)),
            const((H1, H2)), const((1, H2)),
            const((H2, D_OUT)), const((1, D_OUT)),
        ],
        out_specs=pl.BlockSpec((TB, D_OUT), lambda i: (i, 0)),
        compiler_params=pltpu.CompilerParams(
            dimension_semantics=("parallel",),   # megacore batch sharding on v7x
            vmem_limit_bytes=32 << 20,
        ),
    )(x, w1b, b1, w2b, b2, w3b, b3)

    return out


def init_params(key):
    """Deterministic init mirroring nn.Linear's U(-1/sqrt(fan_in), 1/sqrt(fan_in))."""
    dims = [(D_IN, H1), (H1, H2), (H2, D_OUT)]
    params = []
    for (fan_in, fan_out) in dims:
        key, kw, kb = jax.random.split(key, 3)
        bound = 1.0 / jnp.sqrt(fan_in)
        w = jax.random.uniform(kw, (fan_in, fan_out), jnp.float32, -bound, bound)
        b = jax.random.uniform(kb, (1, fan_out), jnp.float32, -bound, bound)
        params += [w, b]
    return params


def reference(x, w1, b1, w2, b2, w3, b3):
    h1 = jnp.maximum(x @ w1 + b1, 0.0)
    h2 = jnp.maximum(h1 @ w2 + b2, 0.0)
    return h2 @ w3 + b3


if __name__ == "__main__":
    key = jax.random.PRNGKey(0)
    key, kx = jax.random.split(key)
    batch = 8
    x = jax.random.normal(kx, (batch, D_IN), jnp.float32)

    w1, b1, w2, b2, w3, b3 = init_params(key)

    out = three_layer_net(x, w1, b1, w2, b2, w3, b3)
    out = jax.block_until_ready(out)

    ref = reference(x, w1, b1, w2, b2, w3, b3)
    assert out.shape == (batch, D_OUT), out.shape
    # bf16 MXU operands: expect ~1e-3 relative error vs the f32 reference.
    max_err = float(jnp.max(jnp.abs(out - ref)))
    assert jnp.allclose(out, ref, atol=3e-2, rtol=3e-2), f"mismatch vs reference (max abs err {max_err})"

    print("KERNEL_OK")
</pallas_src>

<mosaic_0001>
module attributes {stable_mosaic.version = 11 : i64} {
  func.func @_mlp_kernel(%arg0: i32, %arg1: memref<8x257xf32, #tpu.memory_space<vmem>>, %arg2: memref<257x512xbf16, #tpu.memory_space<vmem>>, %arg3: memref<1x512xf32, #tpu.memory_space<vmem>>, %arg4: memref<512x256xbf16, #tpu.memory_space<vmem>>, %arg5: memref<1x256xf32, #tpu.memory_space<vmem>>, %arg6: memref<256x257xbf16, #tpu.memory_space<vmem>>, %arg7: memref<1x257xf32, #tpu.memory_space<vmem>>, %arg8: memref<8x257xf32, #tpu.memory_space<vmem>>) attributes {dimension_semantics = [#tpu.dimension_semantics<parallel>], iteration_bounds = array<i64: 1>, scalar_prefetch = 0 : i64, scratch_operands = 0 : i64, tpu.core_type = #tpu.core_type<tc>, window_params = [{transform_indices = @transform_0, window_bounds = array<i64: 8, 257>}, {pipeline_mode = #tpu.pipeline_mode<synchronous>, transform_indices = @transform_1, window_bounds = array<i64: 257, 512>}, {pipeline_mode = #tpu.pipeline_mode<synchronous>, transform_indices = @transform_2, window_bounds = array<i64: 1, 512>}, {pipeline_mode = #tpu.pipeline_mode<synchronous>, transform_indices = @transform_3, window_bounds = array<i64: 512, 256>}, {pipeline_mode = #tpu.pipeline_mode<synchronous>, transform_indices = @transform_4, window_bounds = array<i64: 1, 256>}, {pipeline_mode = #tpu.pipeline_mode<synchronous>, transform_indices = @transform_5, window_bounds = array<i64: 256, 257>}, {pipeline_mode = #tpu.pipeline_mode<synchronous>, transform_indices = @transform_6, window_bounds = array<i64: 1, 257>}, {transform_indices = @transform_7, window_bounds = array<i64: 8, 257>}]} {
    %c0 = arith.constant 0 : index
    %c0_0 = arith.constant 0 : index
    %0 = vector.load %arg1[%c0, %c0_0] : memref<8x257xf32, #tpu.memory_space<vmem>>, vector<8x257xf32>
    %1 = arith.truncf %0 : vector<8x257xf32> to vector<8x257xbf16>
    %c0_1 = arith.constant 0 : index
    %c0_2 = arith.constant 0 : index
    %2 = vector.load %arg2[%c0_1, %c0_2] : memref<257x512xbf16, #tpu.memory_space<vmem>>, vector<257x512xbf16>
    %cst = arith.constant dense<0.000000e+00> : vector<8x512xf32>
    %3 = tpu.matmul %1, %2, %cst {dimension_numbers = #tpu.dot_dimension_numbers<[1], [0], [0], [1], [0, 0, 1, 1], [], []>} : vector<8x257xbf16>, vector<257x512xbf16>, vector<8x512xf32> -> vector<8x512xf32>
    %c0_3 = arith.constant 0 : index
    %c0_4 = arith.constant 0 : index
    %4 = vector.load %arg3[%c0_3, %c0_4] : memref<1x512xf32, #tpu.memory_space<vmem>>, vector<1x512xf32>
    %5 = vector.broadcast %4 : vector<1x512xf32> to vector<8x512xf32>
    %6 = arith.addf %3, %5 : vector<8x512xf32>
    %cst_5 = arith.constant 0.000000e+00 : f32
    %7 = vector.broadcast %cst_5 : f32 to vector<8x512xf32>
    %8 = arith.maximumf %6, %7 : vector<8x512xf32>
    %9 = arith.truncf %8 : vector<8x512xf32> to vector<8x512xbf16>
    %c0_6 = arith.constant 0 : index
    %c0_7 = arith.constant 0 : index
    %10 = vector.load %arg4[%c0_6, %c0_7] : memref<512x256xbf16, #tpu.memory_space<vmem>>, vector<512x256xbf16>
    %cst_8 = arith.constant dense<0.000000e+00> : vector<8x256xf32>
    %11 = tpu.matmul %9, %10, %cst_8 {dimension_numbers = #tpu.dot_dimension_numbers<[1], [0], [0], [1], [0, 0, 1, 1], [], []>} : vector<8x512xbf16>, vector<512x256xbf16>, vector<8x256xf32> -> vector<8x256xf32>
    %c0_9 = arith.constant 0 : index
    %c0_10 = arith.constant 0 : index
    %12 = vector.load %arg5[%c0_9, %c0_10] : memref<1x256xf32, #tpu.memory_space<vmem>>, vector<1x256xf32>
    %13 = vector.broadcast %12 : vector<1x256xf32> to vector<8x256xf32>
    %14 = arith.addf %11, %13 : vector<8x256xf32>
    %cst_11 = arith.constant 0.000000e+00 : f32
    %15 = vector.broadcast %cst_11 : f32 to vector<8x256xf32>
    %16 = arith.maximumf %14, %15 : vector<8x256xf32>
    %17 = arith.truncf %16 : vector<8x256xf32> to vector<8x256xbf16>
    %c0_12 = arith.constant 0 : index
    %c0_13 = arith.constant 0 : index
    %18 = vector.load %arg6[%c0_12, %c0_13] : memref<256x257xbf16, #tpu.memory_space<vmem>>, vector<256x257xbf16>
    %cst_14 = arith.constant dense<0.000000e+00> : vector<8x257xf32>
    %19 = tpu.matmul %17, %18, %cst_14 {dimension_numbers = #tpu.dot_dimension_numbers<[1], [0], [0], [1], [0, 0, 1, 1], [], []>} : vector<8x256xbf16>, vector<256x257xbf16>, vector<8x257xf32> -> vector<8x257xf32>
    %c0_15 = arith.constant 0 : index
    %c0_16 = arith.constant 0 : index
    %20 = vector.load %arg7[%c0_15, %c0_16] : memref<1x257xf32, #tpu.memory_space<vmem>>, vector<1x257xf32>
    %21 = vector.broadcast %20 : vector<1x257xf32> to vector<8x257xf32>
    %22 = arith.addf %19, %21 : vector<8x257xf32>
    %c0_17 = arith.constant 0 : index
    %c0_18 = arith.constant 0 : index
    %23 = vector.load %arg8[%c0_17, %c0_18] : memref<8x257xf32, #tpu.memory_space<vmem>>, vector<8x257xf32>
    tpu.vector_store %arg8[%c0_17, %c0_18], %22 {strides = array<i32>} : memref<8x257xf32, #tpu.memory_space<vmem>>, vector<8x257xf32>,
    return
  }
  func.func @transform_0(%arg0: i32) -> (i32, i32) {
    %c0_i32 = arith.constant 0 : i32
    %c0_i32_0 = arith.constant 0 : i32
    return %arg0, %c0_i32 : i32, i32
  }
  func.func @transform_1(%arg0: i32) -> (i32, i32) {
    %c0_i32 = arith.constant 0 : i32
    %c0_i32_0 = arith.constant 0 : i32
    %c0_i32_1 = arith.constant 0 : i32
    return %c0_i32, %c0_i32_0 : i32, i32
  }
  func.func @transform_2(%arg0: i32) -> (i32, i32) {
    %c0_i32 = arith.constant 0 : i32
    %c0_i32_0 = arith.constant 0 : i32
    %c0_i32_1 = arith.constant 0 : i32
    return %c0_i32, %c0_i32_0 : i32, i32
  }
  func.func @transform_3(%arg0: i32) -> (i32, i32) {
    %c0_i32 = arith.constant 0 : i32
    %c0_i32_0 = arith.constant 0 : i32
    %c0_i32_1 = arith.constant 0 : i32
    return %c0_i32, %c0_i32_0 : i32, i32
  }
  func.func @transform_4(%arg0: i32) -> (i32, i32) {
    %c0_i32 = arith.constant 0 : i32
    %c0_i32_0 = arith.constant 0 : i32
    %c0_i32_1 = arith.constant 0 : i32
    return %c0_i32, %c0_i32_0 : i32, i32
  }
  func.func @transform_5(%arg0: i32) -> (i32, i32) {
    %c0_i32 = arith.constant 0 : i32
    %c0_i32_0 = arith.constant 0 : i32
    %c0_i32_1 = arith.constant 0 : i32
    return %c0_i32, %c0_i32_0 : i32, i32
  }
  func.func @transform_6(%arg0: i32) -> (i32, i32) {
    %c0_i32 = arith.constant 0 : i32
    %c0_i32_0 = arith.constant 0 : i32
    %c0_i32_1 = arith.constant 0 : i32
    return %c0_i32, %c0_i32_0 : i32, i32
  }
  func.func @transform_7(%arg0: i32) -> (i32, i32) {
    %c0_i32 = arith.constant 0 : i32
    %c0_i32_0 = arith.constant 0 : i32
    return %arg0, %c0_i32 : i32, i32
  }
}

</mosaic_0001>

<llo_original>
// kernel: tpu_custom_call.1
$region0: #{tpu_custom_call.1}
  #allocation0 [shape = 'u32[]', space=smem, size = 0x4, offset = 0x4, fixed_abs, tag = 'smem constant byte address 0x4 - core index']
  #allocation1 [shape = 'u32[144,128]{1,0:T(1,128)}', space=vmem, size = 0x12000, scoped, tag = 'internal scratch']
  %s0 = inlined_call_operand.vmem [shape: f32[8,257], index: 0, kind: input, shape index: {}]
  %s1 = inlined_call_operand.vmem [shape: bf16[257,512], index: 1, kind: input, shape index: {}]
  %s2 = inlined_call_operand.vmem [shape: f32[1,512], index: 2, kind: input, shape index: {}]
  %s3 = inlined_call_operand.hbm [shape: bf16[512,256], index: 3, kind: input, shape index: {}]
  %s4 = inlined_call_operand.vmem [shape: f32[1,256], index: 4, kind: input, shape index: {}]
  %s5 = inlined_call_operand.vmem [shape: bf16[256,257], index: 5, kind: input, shape index: {}]
  %s6 = inlined_call_operand.vmem [shape: f32[1,257], index: 6, kind: input, shape index: {}]
  %s7 = inlined_call_operand.hbm [shape: f32[8,257], index: 7, kind: output, shape index: {}]
  %s8 = sld [smem:[#allocation0]]
  $region42: #{tpu_custom_call.1} parent=0
    _
  %s10 = ssub.s32 1, %s8
  %s11 = scalar_select 0, %s10, %s8
  $region1: #{tpu_custom_call.1} parent=0
    #allocation2 [shape = 'u8[262144]{0}', space=vmem, size = 0x40000, scoped, tag = 'input window, operand 3, single buffered']
    #allocation3 [shape = 's32[1]{0}', space=sflag, size = 0x4, scoped, tag = 'scoped memory for tpu_custom_call.1']
    #allocation4 [shape = 's32[1]{0}', space=sflag, size = 0x4, scoped, tag = 'scoped memory for tpu_custom_call.1']
    #allocation5 [shape = 'u8[12288]{0}', space=vmem, size = 0x3000, scoped, tag = 'output window, operand 0, single buffered']
    %12 = vsyncpa [#allocation3], 0
    %13 = vsyncpa [#allocation4], 0
    // Predicated region
    $region2: #{tpu_custom_call.1} parent=1 // pred_check
      _
    $region3: #{tpu_custom_call.1} parent=1 // pred_check_branch
      %15 = sbr.rel (0) target = $region5
    $region4: #{tpu_custom_call.1} parent=1 // pred_region
      _
    $region5: #{tpu_custom_call.1} parent=1 // pred_fallthru
      _
    // Predicated region
    $region6: #{tpu_custom_call.1} parent=1 // pred_check
      _
    $region7: #{tpu_custom_call.1} parent=1 // pred_check_branch
      %17 = sbr.rel (0) target = $region9
    $region8: #{tpu_custom_call.1} parent=1 // pred_region
      _
    $region9: #{tpu_custom_call.1} parent=1 // pred_fallthru
      _
    // Predicated region
    $region10: #{tpu_custom_call.1} parent=1 // pred_check
      _
    $region11: #{tpu_custom_call.1} parent=1 // pred_check_branch
      %19 = sbr.rel (0) target = $region13
    $region12: #{tpu_custom_call.1} parent=1 // pred_region
      _
    $region13: #{tpu_custom_call.1} parent=1 // pred_fallthru
      _
    // Predicated region
    $region14: #{tpu_custom_call.1} parent=1 // pred_check
      _
    $region15: #{tpu_custom_call.1} parent=1 // pred_check_branch
      %21 = sbr.rel (0) target = $region17
    $region16: #{tpu_custom_call.1} parent=1 // pred_region
      %s23 = ssub.s32 8192, 8192
      %24 = vsyncadd [#allocation3], %s23
      %s25 = sshll.u32 [#allocation2], 4
      %s26 = int_to_ptr.vmem [resolvable:$true] %s25
      %31 = dma.hbm_to_vmem [thread:$0]  %s3, 8192, %s26, [#allocation3], 128, 128, 8
    $region17: #{tpu_custom_call.1} parent=1 // pred_fallthru
      _
    // Predicated region
    $region18: #{tpu_custom_call.1} parent=1 // pred_check
      _
    $region19: #{tpu_custom_call.1} parent=1 // pred_check_branch
      %33 = sbr.rel (0) target = $region21
    $region20: #{tpu_custom_call.1} parent=1 // pred_region
      _
    $region21: #{tpu_custom_call.1} parent=1 // pred_fallthru
      _
    // Predicated region
    $region22: #{tpu_custom_call.1} parent=1 // pred_check
      _
    $region23: #{tpu_custom_call.1} parent=1 // pred_check_branch
      %35 = sbr.rel (0) target = $region25
    $region24: #{tpu_custom_call.1} parent=1 // pred_region
      _
    $region25: #{tpu_custom_call.1} parent=1 // pred_fallthru
      _
    // Predicated region
    $region26: #{tpu_custom_call.1} parent=1 // pred_check
      _
    $region27: #{tpu_custom_call.1} parent=1 // pred_check_branch
      %37 = sbr.rel (0) target = $region29
    $region28: #{tpu_custom_call.1} parent=1 // pred_region
      _
    $region29: #{tpu_custom_call.1} parent=1 // pred_fallthru
      _
    // Predicated region
    $region30: #{tpu_custom_call.1} parent=1 // pred_check
      _
    $region31: #{tpu_custom_call.1} parent=1 // pred_check_branch
      %39 = sbr.rel (0) target = $region33
    $region32: #{tpu_custom_call.1} parent=1 // pred_region
      %40 = dma.done [#allocation3], 8192
    $region33: #{tpu_custom_call.1} parent=1 // pred_fallthru
      _
    %v42 = vld [vmem:[%s0] sm:$0xff]
    %v43 = vld [vmem:[%s0 + $0x8] sm:$0xff]
    %v44 = vld [vmem:[%s0 + $0x10] sm:$0xff]
    %v45 = vpack.c.bf16 %v42, %v42
    %v46 = vpack.c.bf16 %v43, %v43
    %v47 = vpack.c.bf16 %v44, %v44
    %v48 = vld [vmem:[%s1] sm:$0xff]
    %v49 = vld [vmem:[%s1 + $0x8] sm:$0xff]
    %v50 = vld [vmem:[%s1 + $0x10] sm:$0xff]
    %v51 = vld [vmem:[%s1 + $0x18] sm:$0xff]
    %v52 = vld [vmem:[%s1 + $0x20] sm:$0xff]
    %v53 = vld [vmem:[%s1 + $0x28] sm:$0xff]
    %v54 = vld [vmem:[%s1 + $0x30] sm:$0xff]
    %v55 = vld [vmem:[%s1 + $0x38] sm:$0xff]
    %v56 = vld [vmem:[%s1 + $0x40] sm:$0xff]
    %v57 = vld [vmem:[%s1 + $0x48] sm:$0xff]
    %v58 = vld [vmem:[%s1 + $0x50] sm:$0xff]
    %v59 = vld [vmem:[%s1 + $0x58] sm:$0xff]
    %v60 = vld [vmem:[%s1 + $0x60] sm:$0xff]
    %v61 = vld [vmem:[%s1 + $0x68] sm:$0xff]
    %v62 = vld [vmem:[%s1 + $0x70] sm:$0xff]
    %v63 = vld [vmem:[%s1 + $0x78] sm:$0xff]
    %v64 = vld [vmem:[%s1 + $0x80] sm:$0xff]
    %v65 = vld [vmem:[%s1 + $0x88] sm:$0xff]
    %v66 = vld [vmem:[%s1 + $0x90] sm:$0xff]
    %v67 = vld [vmem:[%s1 + $0x98] sm:$0xff]
    %v68 = vld [vmem:[%s1 + $0xa0] sm:$0xff]
    %v69 = vld [vmem:[%s1 + $0xa8] sm:$0xff]
    %v70 = vld [vmem:[%s1 + $0xb0] sm:$0xff]
    %v71 = vld [vmem:[%s1 + $0xb8] sm:$0xff]
    %v72 = vld [vmem:[%s1 + $0xc0] sm:$0xff]
    %v73 = vld [vmem:[%s1 + $0xc8] sm:$0xff]
    %v74 = vld [vmem:[%s1 + $0xd0] sm:$0xff]
    %v75 = vld [vmem:[%s1 + $0xd8] sm:$0xff]
    %v76 = vld [vmem:[%s1 + $0xe0] sm:$0xff]
    %v77 = vld [vmem:[%s1 + $0xe8] sm:$0xff]
    %v78 = vld [vmem:[%s1 + $0xf0] sm:$0xff]
    %v79 = vld [vmem:[%s1 + $0xf8] sm:$0xff]
    %v80 = vld [vmem:[%s1 + $0x100] sm:$0xff]
    %v81 = vld [vmem:[%s1 + $0x108] sm:$0xff]
    %v82 = vld [vmem:[%s1 + $0x110] sm:$0xff]
    %v83 = vld [vmem:[%s1 + $0x118] sm:$0xff]
    %v84 = vld [vmem:[%s1 + $0x120] sm:$0xff]
    %v85 = vld [vmem:[%s1 + $0x128] sm:$0xff]
    %v86 = vld [vmem:[%s1 + $0x130] sm:$0xff]
    %v87 = vld [vmem:[%s1 + $0x138] sm:$0xff]
    %v88 = vld [vmem:[%s1 + $0x140] sm:$0xff]
    %v89 = vld [vmem:[%s1 + $0x148] sm:$0xff]
    %v90 = vld [vmem:[%s1 + $0x150] sm:$0xff]
    %v91 = vld [vmem:[%s1 + $0x158] sm:$0xff]
    %v92 = vld [vmem:[%s1 + $0x160] sm:$0xff]
    %v93 = vld [vmem:[%s1 + $0x168] sm:$0xff]
    %v94 = vld [vmem:[%s1 + $0x170] sm:$0xff]
    %v95 = vld [vmem:[%s1 + $0x178] sm:$0xff]
    %v96 = vld [vmem:[%s1 + $0x180] sm:$0xff]
    %v97 = vld [vmem:[%s1 + $0x188] sm:$0xff]
    %v98 = vld [vmem:[%s1 + $0x190] sm:$0xff]
    %v99 = vld [vmem:[%s1 + $0x198] sm:$0xff]
    %v100 = vld [vmem:[%s1 + $0x1a0] sm:$0xff]
    %v101 = vld [vmem:[%s1 + $0x1a8] sm:$0xff]
    %v102 = vld [vmem:[%s1 + $0x1b0] sm:$0xff]
    %v103 = vld [vmem:[%s1 + $0x1b8] sm:$0xff]
    %v104 = vld [vmem:[%s1 + $0x1c0] sm:$0xff]
    %v105 = vld [vmem:[%s1 + $0x1c8] sm:$0xff]
    %v106 = vld [vmem:[%s1 + $0x1d0] sm:$0xff]
    %v107 = vld [vmem:[%s1 + $0x1d8] sm:$0xff]
    %v108 = vld [vmem:[%s1 + $0x1e0] sm:$0xff]
    %v109 = vld [vmem:[%s1 + $0x1e8] sm:$0xff]
    %v110 = vld [vmem:[%s1 + $0x1f0] sm:$0xff]
    %v111 = vld [vmem:[%s1 + $0x1f8] sm:$0xff]
    %v112 = vld [vmem:[%s1 + $0x200] sm:$0x11]
    %v113 = vld [vmem:[%s1 + $0x208] sm:$0x11]
    %v114 = vld [vmem:[%s2] sm:$0xf]
    %v116 = vlaneseq
    %v117 = vshrl.u32 %v116, 7
    %v118 = vsub.s32 0, %v117
    %v119 = vrot.slane %v114, %v118
    %v120 = vlaneseq
    %v121 = vshrl.u32 %v120, 7
    %v122 = vsub.s32 1, %v121
    %v123 = vrot.slane %v114, %v122
    %v124 = vlaneseq
    %v125 = vshrl.u32 %v124, 7
    %v126 = vsub.s32 2, %v125
    %v127 = vrot.slane %v114, %v126
    %v128 = vlaneseq
    %v129 = vshrl.u32 %v128, 7
    %v130 = vsub.s32 3, %v129
    %v131 = vrot.slane %v114, %v130
    %v202 = vunpack.c.l.b16 %v48
    %v203 = vunpack.c.h.b16 %v48
    %v204 = vunpack.c.l.b16 %v49
    %v205 = vunpack.c.h.b16 %v49
    %v206 = vunpack.c.l.b16 %v50
    %v207 = vunpack.c.h.b16 %v50
    %v208 = vunpack.c.l.b16 %v51
    %v209 = vunpack.c.h.b16 %v51
    %v210 = vunpack.c.l.b16 %v52
    %v211 = vunpack.c.h.b16 %v52
    %v212 = vunpack.c.l.b16 %v53
    %v213 = vunpack.c.h.b16 %v53
    %v214 = vunpack.c.l.b16 %v54
    %v215 = vunpack.c.h.b16 %v54
    %v216 = vunpack.c.l.b16 %v55
    %v217 = vunpack.c.h.b16 %v55
    %v218 = vunpack.c.l.b16 %v56
    %v219 = vunpack.c.h.b16 %v56
    %v220 = vunpack.c.l.b16 %v57
    %v221 = vunpack.c.h.b16 %v57
    %v222 = vunpack.c.l.b16 %v58
    %v223 = vunpack.c.h.b16 %v58
    %v224 = vunpack.c.l.b16 %v59
    %v225 = vunpack.c.h.b16 %v59
    %v226 = vunpack.c.l.b16 %v60
    %v227 = vunpack.c.h.b16 %v60
    %v228 = vunpack.c.l.b16 %v61
    %v229 = vunpack.c.h.b16 %v61
    %v230 = vunpack.c.l.b16 %v62
    %v231 = vunpack.c.h.b16 %v62
    %v232 = vunpack.c.l.b16 %v63
    %v233 = vunpack.c.h.b16 %v63
    %v234 = vunpack.c.l.b16 %v64
    %v235 = vunpack.c.h.b16 %v64
    %v236 = vunpack.c.l.b16 %v65
    %v237 = vunpack.c.h.b16 %v65
    %v238 = vunpack.c.l.b16 %v66
    %v239 = vunpack.c.h.b16 %v66
    %v240 = vunpack.c.l.b16 %v67
    %v241 = vunpack.c.h.b16 %v67
    %v242 = vunpack.c.l.b16 %v68
    %v243 = vunpack.c.h.b16 %v68
    %v244 = vunpack.c.l.b16 %v69
    %v245 = vunpack.c.h.b16 %v69
    %v246 = vunpack.c.l.b16 %v70
    %v247 = vunpack.c.h.b16 %v70
    %v248 = vunpack.c.l.b16 %v71
    %v249 = vunpack.c.h.b16 %v71
    %v250 = vunpack.c.l.b16 %v72
    %v251 = vunpack.c.h.b16 %v72
    %v252 = vunpack.c.l.b16 %v73
    %v253 = vunpack.c.h.b16 %v73
    %v254 = vunpack.c.l.b16 %v74
    %v255 = vunpack.c.h.b16 %v74
    %v256 = vunpack.c.l.b16 %v75
    %v257 = vunpack.c.h.b16 %v75
    %v258 = vunpack.c.l.b16 %v76
    %v259 = vunpack.c.h.b16 %v76
    %v260 = vunpack.c.l.b16 %v77
    %v261 = vunpack.c.h.b16 %v77
    %v262 = vunpack.c.l.b16 %v78
    %v263 = vunpack.c.h.b16 %v78
    %v264 = vunpack.c.l.b16 %v79
    %v265 = vunpack.c.h.b16 %v79
    %v266 = vunpack.c.l.b16 %v80
    %v267 = vunpack.c.h.b16 %v80
    %v268 = vunpack.c.l.b16 %v81
    %v269 = vunpack.c.h.b16 %v81
    %v270 = vunpack.c.l.b16 %v82
    %v271 = vunpack.c.h.b16 %v82
    %v272 = vunpack.c.l.b16 %v83
    %v273 = vunpack.c.h.b16 %v83
    %v274 = vunpack.c.l.b16 %v84
    %v275 = vunpack.c.h.b16 %v84
    %v276 = vunpack.c.l.b16 %v85
    %v277 = vunpack.c.h.b16 %v85
    %v278 = vunpack.c.l.b16 %v86
    %v279 = vunpack.c.h.b16 %v86
    %v280 = vunpack.c.l.b16 %v87
    %v281 = vunpack.c.h.b16 %v87
    %v282 = vunpack.c.l.b16 %v88
    %v283 = vunpack.c.h.b16 %v88
    %v284 = vunpack.c.l.b16 %v89
    %v285 = vunpack.c.h.b16 %v89
    %v286 = vunpack.c.l.b16 %v90
    %v287 = vunpack.c.h.b16 %v90
    %v288 = vunpack.c.l.b16 %v91
    %v289 = vunpack.c.h.b16 %v91
    %v290 = vunpack.c.l.b16 %v92
    %v291 = vunpack.c.h.b16 %v92
    %v292 = vunpack.c.l.b16 %v93
    %v293 = vunpack.c.h.b16 %v93
    %v294 = vunpack.c.l.b16 %v94
    %v295 = vunpack.c.h.b16 %v94
    %v296 = vunpack.c.l.b16 %v95
    %v297 = vunpack.c.h.b16 %v95
    %v298 = vunpack.c.l.b16 %v96
    %v299 = vunpack.c.h.b16 %v96
    %v300 = vunpack.c.l.b16 %v97
    %v301 = vunpack.c.h.b16 %v97
    %v302 = vunpack.c.l.b16 %v98
    %v303 = vunpack.c.h.b16 %v98
    %v304 = vunpack.c.l.b16 %v99
    %v305 = vunpack.c.h.b16 %v99
    %v306 = vunpack.c.l.b16 %v100
    %v307 = vunpack.c.h.b16 %v100
    %v308 = vunpack.c.l.b16 %v101
    %v309 = vunpack.c.h.b16 %v101
    %v310 = vunpack.c.l.b16 %v102
    %v311 = vunpack.c.h.b16 %v102
    %v312 = vunpack.c.l.b16 %v103
    %v313 = vunpack.c.h.b16 %v103
    %v314 = vunpack.c.l.b16 %v104
    %v315 = vunpack.c.h.b16 %v104
    %v316 = vunpack.c.l.b16 %v105
    %v317 = vunpack.c.h.b16 %v105
    %v318 = vunpack.c.l.b16 %v106
    %v319 = vunpack.c.h.b16 %v106
    %v320 = vunpack.c.l.b16 %v107
    %v321 = vunpack.c.h.b16 %v107
    %v322 = vunpack.c.l.b16 %v108
    %v323 = vunpack.c.h.b16 %v108
    %v324 = vunpack.c.l.b16 %v109
    %v325 = vunpack.c.h.b16 %v109
    %v326 = vunpack.c.l.b16 %v110
    %v327 = vunpack.c.h.b16 %v110
    %v328 = vunpack.c.l.b16 %v111
    %v329 = vunpack.c.h.b16 %v111
    %v330 = vunpack.c.l.b16 %v112
    %v331 = vunpack.c.h.b16 %v112
    %v332 = vunpack.c.l.b16 %v113
    %v333 = vunpack.c.h.b16 %v113
    %v334 = vpack.c.b16 %v206, %v202
    %v335 = vpack.c.b16 %v207, %v203
    %v336 = vpack.c.b16 %v208, %v204
    %v337 = vpack.c.b16 %v209, %v205
    %v338 = vpack.c.b16 %v214, %v210
    %v339 = vpack.c.b16 %v215, %v211
    %v340 = vpack.c.b16 %v216, %v212
    %v341 = vpack.c.b16 %v217, %v213
    %v342 = vpack.c.b16 %v222, %v218
    %v343 = vpack.c.b16 %v223, %v219
    %v344 = vpack.c.b16 %v224, %v220
    %v345 = vpack.c.b16 %v225, %v221
    %v346 = vpack.c.b16 %v230, %v226
    %v347 = vpack.c.b16 %v231, %v227
    %v348 = vpack.c.b16 %v232, %v228
    %v349 = vpack.c.b16 %v233, %v229
    %v350 = vpack.c.b16 %v238, %v234
    %v351 = vpack.c.b16 %v239, %v235
    %v352 = vpack.c.b16 %v240, %v236
    %v353 = vpack.c.b16 %v241, %v237
    %v354 = vpack.c.b16 %v246, %v242
    %v355 = vpack.c.b16 %v247, %v243
    %v356 = vpack.c.b16 %v248, %v244
    %v357 = vpack.c.b16 %v249, %v245
    %v358 = vpack.c.b16 %v254, %v250
    %v359 = vpack.c.b16 %v255, %v251
    %v360 = vpack.c.b16 %v256, %v252
    %v361 = vpack.c.b16 %v257, %v253
    %v362 = vpack.c.b16 %v262, %v258
    %v363 = vpack.c.b16 %v263, %v259
    %v364 = vpack.c.b16 %v264, %v260
    %v365 = vpack.c.b16 %v265, %v261
    %v366 = vpack.c.b16 %v270, %v266
    %v367 = vpack.c.b16 %v271, %v267
    %v368 = vpack.c.b16 %v272, %v268
    %v369 = vpack.c.b16 %v273, %v269
    %v370 = vpack.c.b16 %v278, %v274
    %v371 = vpack.c.b16 %v279, %v275
    %v372 = vpack.c.b16 %v280, %v276
    %v373 = vpack.c.b16 %v281, %v277
    %v374 = vpack.c.b16 %v286, %v282
    %v375 = vpack.c.b16 %v287, %v283
    %v376 = vpack.c.b16 %v288, %v284
    %v377 = vpack.c.b16 %v289, %v285
    %v378 = vpack.c.b16 %v294, %v290
    %v379 = vpack.c.b16 %v295, %v291
    %v380 = vpack.c.b16 %v296, %v292
    %v381 = vpack.c.b16 %v297, %v293
    %v382 = vpack.c.b16 %v302, %v298
    %v383 = vpack.c.b16 %v303, %v299
    %v384 = vpack.c.b16 %v304, %v300
    %v385 = vpack.c.b16 %v305, %v301
    %v386 = vpack.c.b16 %v310, %v306
    %v387 = vpack.c.b16 %v311, %v307
    %v388 = vpack.c.b16 %v312, %v308
    %v389 = vpack.c.b16 %v313, %v309
    %v390 = vpack.c.b16 %v318, %v314
    %v391 = vpack.c.b16 %v319, %v315
    %v392 = vpack.c.b16 %v320, %v316
    %v393 = vpack.c.b16 %v321, %v317
    %v394 = vpack.c.b16 %v326, %v322
    %v395 = vpack.c.b16 %v327, %v323
    %v396 = vpack.c.b16 %v328, %v324
    %v397 = vpack.c.b16 %v329, %v325
    %v398 = vpack.c.b16 %v330, %v330
    %v399 = vpack.c.b16 %v331, %v331
    %v400 = vpack.c.b16 %v332, %v332
    %v401 = vpack.c.b16 %v333, %v333
    %vm466 = vcmask 7168
    %v468 = vsel %vm466, %v47, 0
    %vm470 = vcmask 1040384
    %v471 = vsel 0, 4294967295, 65535
    %v472 = vsel %vm470, %v471, 0
    %v474 = vand.u32 %v398, %v472
    %v477 = vand.u32 %v399, %v472
    %v480 = vand.u32 %v400, %v472
    %v483 = vand.u32 %v401, %v472
    %485 = vmatprep.subr.bf16.mxu0 %v363
    %486 = vmatpush1.bf16.msra.mxu0 %v362
    %487 = vmatprep.subr.bf16.mxu0 %v359
    %488 = vmatpush1.bf16.msra.mxu0 %v358
    %489 = vmatprep.subr.bf16.mxu0 %v355
    %490 = vmatpush1.bf16.msra.mxu0 %v354
    %491 = vmatprep.subr.bf16.mxu0 %v351
    %492 = vmatpush1.bf16.msra.mxu0 %v350
    %493 = vmatprep.subr.bf16.mxu0 %v347
    %494 = vmatpush1.bf16.msra.mxu0 %v346
    %495 = vmatprep.subr.bf16.mxu0 %v343
    %496 = vmatpush1.bf16.msra.mxu0 %v342
    %497 = vmatprep.subr.bf16.mxu0 %v339
    %498 = vmatpush1.bf16.msra.mxu0 %v338
    %499 = vmatprep.subr.bf16.mxu0 %v335
    %500 = vmatpush1.bf16.msra.mxu0 %v334
    %501 = vmatprep.subr.bf16.mxu0 %v395
    %502 = vmatpush2.bf16.msra.mxu0 %v394
    %503 = vmatprep.subr.bf16.mxu0 %v391
    %504 = vmatpush2.bf16.msra.mxu0 %v390
    %505 = vmatprep.subr.bf16.mxu0 %v387
    %506 = vmatpush2.bf16.msra.mxu0 %v386
    %507 = vmatprep.subr.bf16.mxu0 %v383
    %508 = vmatpush2.bf16.msra.mxu0 %v382
    %509 = vmatprep.subr.bf16.mxu0 %v379
    %510 = vmatpush2.bf16.msra.mxu0 %v378
    %511 = vmatprep.subr.bf16.mxu0 %v375
    %512 = vmatpush2.bf16.msra.mxu0 %v374
    %513 = vmatprep.subr.bf16.mxu0 %v371
    %514 = vmatpush2.bf16.msra.mxu0 %v370
    %515 = vmatprep.subr.bf16.mxu0 %v367
    %516 = vmatpush2.bf16.msra.mxu0 %v366
    %517 = vmatprep.mubr.bf16.mxu0 %v46
    %518 = vmatmul.mubr.bf16.gmra.mxu0 %v45
    %v519 = vpop.f32.mrf.mxu0
    %v520 = vadd.f32 %v119, %v519
    %v521 = vpop.f32.mrf.mxu0
    %v522 = vadd.f32 %v123, %v521
    %v523 = vpop.f32.mrf.mxu0
    %v524 = vpop.f32.mrf.mxu0
    %525 = vdwg.mxu0
    %526 = vmatprep.subr.bf16.mxu0 0
    %527 = vmatpush1.bf16.msra.mxu0 0
    %528 = vmatprep.subr.bf16.mxu0 0
    %529 = vmatpush1.bf16.msra.mxu0 0
    %530 = vmatprep.subr.bf16.mxu0 0
    %531 = vmatpush1.bf16.msra.mxu0 0
    %532 = vmatprep.subr.bf16.mxu0 0
    %533 = vmatpush1.bf16.msra.mxu0 0
    %534 = vmatprep.subr.bf16.mxu0 0
    %535 = vmatpush1.bf16.msra.mxu0 0
    %536 = vmatprep.subr.bf16.mxu0 0
    %537 = vmatpush1.bf16.msra.mxu0 0
    %538 = vmatprep.subr.bf16.mxu0 0
    %539 = vmatpush1.bf16.msra.mxu0 0
    %540 = vmatprep.subr.bf16.mxu0 %v477
    %541 = vmatpush1.bf16.msra.mxu0 %v474
    %542 = vmatprep.subr.bf16.mxu0 0
    %543 = vmatpush2.bf16.msra.mxu0 0
    %544 = vmatprep.subr.bf16.mxu0 0
    %545 = vmatpush2.bf16.msra.mxu0 0
    %546 = vmatprep.subr.bf16.mxu0 0
    %547 = vmatpush2.bf16.msra.mxu0 0
    %548 = vmatprep.subr.bf16.mxu0 0
    %549 = vmatpush2.bf16.msra.mxu0 0
    %550 = vmatprep.subr.bf16.mxu0 0
    %551 = vmatpush2.bf16.msra.mxu0 0
    %552 = vmatprep.subr.bf16.mxu0 0
    %553 = vmatpush2.bf16.msra.mxu0 0
    %554 = vmatprep.subr.bf16.mxu0 0
    %555 = vmatpush2.bf16.msra.mxu0 0
    %556 = vmatprep.subr.bf16.mxu0 0
    %557 = vmatpush2.bf16.msra.mxu0 0
    %558 = vmatprep.mubr.bf16.mxu0 0
    %559 = vmatmul.mubr.bf16.gmra.mxu0 %v468
    %v560 = vpop.f32.mrf.mxu0
    %v561 = vadd.f32 %v520, %v560
    %v562 = vpop.f32.mrf.mxu0
    %v563 = vadd.f32 %v522, %v562
    %v564 = vpop.f32.mrf.mxu0
    %v565 = vpop.f32.mrf.mxu0
    %566 = vdwg.mxu0
    %567 = vmatprep.subr.bf16.mxu0 %v365
    %568 = vmatpush1.bf16.msra.mxu0 %v364
    %569 = vmatprep.subr.bf16.mxu0 %v361
    %570 = vmatpush1.bf16.msra.mxu0 %v360
    %571 = vmatprep.subr.bf16.mxu0 %v357
    %572 = vmatpush1.bf16.msra.mxu0 %v356
    %573 = vmatprep.subr.bf16.mxu0 %v353
    %574 = vmatpush1.bf16.msra.mxu0 %v352
    %575 = vmatprep.subr.bf16.mxu0 %v349
    %576 = vmatpush1.bf16.msra.mxu0 %v348
    %577 = vmatprep.subr.bf16.mxu0 %v345
    %578 = vmatpush1.bf16.msra.mxu0 %v344
    %579 = vmatprep.subr.bf16.mxu0 %v341
    %580 = vmatpush1.bf16.msra.mxu0 %v340
    %581 = vmatprep.subr.bf16.mxu0 %v337
    %582 = vmatpush1.bf16.msra.mxu0 %v336
    %583 = vmatprep.subr.bf16.mxu0 %v397
    %584 = vmatpush2.bf16.msra.mxu0 %v396
    %585 = vmatprep.subr.bf16.mxu0 %v393
    %586 = vmatpush2.bf16.msra.mxu0 %v392
    %587 = vmatprep.subr.bf16.mxu0 %v389
    %588 = vmatpush2.bf16.msra.mxu0 %v388
    %589 = vmatprep.subr.bf16.mxu0 %v385
    %590 = vmatpush2.bf16.msra.mxu0 %v384
    %591 = vmatprep.subr.bf16.mxu0 %v381
    %592 = vmatpush2.bf16.msra.mxu0 %v380
    %593 = vmatprep.subr.bf16.mxu0 %v377
    %594 = vmatpush2.bf16.msra.mxu0 %v376
    %595 = vmatprep.subr.bf16.mxu0 %v373
    %596 = vmatpush2.bf16.msra.mxu0 %v372
    %597 = vmatprep.subr.bf16.mxu0 %v369
    %598 = vmatpush2.bf16.msra.mxu0 %v368
    %599 = vmatprep.mubr.bf16.mxu0 %v46
    %600 = vmatmul.mubr.bf16.gmra.mxu0 %v45
    %v601 = vpop.f32.mrf.mxu0
    %v602 = vadd.f32 %v127, %v601
    %v603 = vpop.f32.mrf.mxu0
    %v604 = vadd.f32 %v131, %v603
    %v605 = vpop.f32.mrf.mxu0
    %v606 = vpop.f32.mrf.mxu0
    %607 = vdwg.mxu0
    %608 = vmatprep.subr.bf16.mxu0 0
    %609 = vmatpush1.bf16.msra.mxu0 0
    %610 = vmatprep.subr.bf16.mxu0 0
    %611 = vmatpush1.bf16.msra.mxu0 0
    %612 = vmatprep.subr.bf16.mxu0 0
    %613 = vmatpush1.bf16.msra.mxu0 0
    %614 = vmatprep.subr.bf16.mxu0 0
    %615 = vmatpush1.bf16.msra.mxu0 0
    %616 = vmatprep.subr.bf16.mxu0 0
    %617 = vmatpush1.bf16.msra.mxu0 0
    %618 = vmatprep.subr.bf16.mxu0 0
    %619 = vmatpush1.bf16.msra.mxu0 0
    %620 = vmatprep.subr.bf16.mxu0 0
    %621 = vmatpush1.bf16.msra.mxu0 0
    %622 = vmatprep.subr.bf16.mxu0 %v483
    %623 = vmatpush1.bf16.msra.mxu0 %v480
    %624 = vmatprep.subr.bf16.mxu0 0
    %625 = vmatpush2.bf16.msra.mxu0 0
    %626 = vmatprep.subr.bf16.mxu0 0
    %627 = vmatpush2.bf16.msra.mxu0 0
    %628 = vmatprep.subr.bf16.mxu0 0
    %629 = vmatpush2.bf16.msra.mxu0 0
    %630 = vmatprep.subr.bf16.mxu0 0
    %631 = vmatpush2.bf16.msra.mxu0 0
    %632 = vmatprep.subr.bf16.mxu0 0
    %633 = vmatpush2.bf16.msra.mxu0 0
    %634 = vmatprep.subr.bf16.mxu0 0
    %635 = vmatpush2.bf16.msra.mxu0 0
    %636 = vmatprep.subr.bf16.mxu0 0
    %637 = vmatpush2.bf16.msra.mxu0 0
    %638 = vmatprep.subr.bf16.mxu0 0
    %639 = vmatpush2.bf16.msra.mxu0 0
    %640 = vmatprep.mubr.bf16.mxu0 0
    %641 = vmatmul.mubr.bf16.gmra.mxu0 %v468
    %v642 = vpop.f32.mrf.mxu0
    %v643 = vadd.f32 %v602, %v642
    %v644 = vpop.f32.mrf.mxu0
    %v645 = vadd.f32 %v604, %v644
    %v646 = vpop.f32.mrf.mxu0
    %v647 = vpop.f32.mrf.mxu0
    %648 = vdwg.mxu0
    %v649 = vmax.f32 %v561, 0.0
    %v650 = vmax.f32 %v563, 0.0
    %v651 = vmax.f32 %v643, 0.0
    %v652 = vmax.f32 %v645, 0.0
    %v653 = vpack.c.bf16 %v649, %v649
    %v654 = vpack.c.bf16 %v650, %v650
    %v655 = vpack.c.bf16 %v651, %v651
    %v656 = vpack.c.bf16 %v652, %v652
    %v657 = vld [vmem:[#allocation2] sm:$0xff]
    %v658 = vld [vmem:[#allocation2 + $0x8] sm:$0xff]
    %v659 = vld [vmem:[#allocation2 + $0x10] sm:$0xff]
    %v660 = vld [vmem:[#allocation2 + $0x18] sm:$0xff]
    %v661 = vld [vmem:[#allocation2 + $0x20] sm:$0xff]
    %v662 = vld [vmem:[#allocation2 + $0x28] sm:$0xff]
    %v663 = vld [vmem:[#allocation2 + $0x30] sm:$0xff]
    %v664 = vld [vmem:[#allocation2 + $0x38] sm:$0xff]
    %v665 = vld [vmem:[#allocation2 + $0x40] sm:$0xff]
    %v666 = vld [vmem:[#allocation2 + $0x48] sm:$0xff]
    %v667 = vld [vmem:[#allocation2 + $0x50] sm:$0xff]
    %v668 = vld [vmem:[#allocation2 + $0x58] sm:$0xff]
    %v669 = vld [vmem:[#allocation2 + $0x60] sm:$0xff]
    %v670 = vld [vmem:[#allocation2 + $0x68] sm:$0xff]
    %v671 = vld [vmem:[#allocation2 + $0x70] sm:$0xff]
    %v672 = vld [vmem:[#allocation2 + $0x78] sm:$0xff]
    %v673 = vld [vmem:[#allocation2 + $0x80] sm:$0xff]
    %v674 = vld [vmem:[#allocation2 + $0x88] sm:$0xff]
    %v675 = vld [vmem:[#allocation2 + $0x90] sm:$0xff]
    %v676 = vld [vmem:[#allocation2 + $0x98] sm:$0xff]
    %v677 = vld [vmem:[#allocation2 + $0xa0] sm:$0xff]
    %v678 = vld [vmem:[#allocation2 + $0xa8] sm:$0xff]
    %v679 = vld [vmem:[#allocation2 + $0xb0] sm:$0xff]
    %v680 = vld [vmem:[#allocation2 + $0xb8] sm:$0xff]
    %v681 = vld [vmem:[#allocation2 + $0xc0] sm:$0xff]
    %v682 = vld [vmem:[#allocation2 + $0xc8] sm:$0xff]
    %v683 = vld [vmem:[#allocation2 + $0xd0] sm:$0xff]
    %v684 = vld [vmem:[#allocation2 + $0xd8] sm:$0xff]
    %v685 = vld [vmem:[#allocation2 + $0xe0] sm:$0xff]
    %v686 = vld [vmem:[#allocation2 + $0xe8] sm:$0xff]
    %v687 = vld [vmem:[#allocation2 + $0xf0] sm:$0xff]
    %v688 = vld [vmem:[#allocation2 + $0xf8] sm:$0xff]
    %v689 = vld [vmem:[#allocation2 + $0x100] sm:$0xff]
    %v690 = vld [vmem:[#allocation2 + $0x108] sm:$0xff]
    %v691 = vld [vmem:[#allocation2 + $0x110] sm:$0xff]
    %v692 = vld [vmem:[#allocation2 + $0x118] sm:$0xff]
    %v693 = vld [vmem:[#allocation2 + $0x120] sm:$0xff]
    %v694 = vld [vmem:[#allocation2 + $0x128] sm:$0xff]
    %v695 = vld [vmem:[#allocation2 + $0x130] sm:$0xff]
    %v696 = vld [vmem:[#allocation2 + $0x138] sm:$0xff]
    %v697 = vld [vmem:[#allocation2 + $0x140] sm:$0xff]
    %v698 = vld [vmem:[#allocation2 + $0x148] sm:$0xff]
    %v699 = vld [vmem:[#allocation2 + $0x150] sm:$0xff]
    %v700 = vld [vmem:[#allocation2 + $0x158] sm:$0xff]
    %v701 = vld [vmem:[#allocation2 + $0x160] sm:$0xff]
    %v702 = vld [vmem:[#allocation2 + $0x168] sm:$0xff]
    %v703 = vld [vmem:[#allocation2 + $0x170] sm:$0xff]
    %v704 = vld [vmem:[#allocation2 + $0x178] sm:$0xff]
    %v705 = vld [vmem:[#allocation2 + $0x180] sm:$0xff]
    %v706 = vld [vmem:[#allocation2 + $0x188] sm:$0xff]
    %v707 = vld [vmem:[#allocation2 + $0x190] sm:$0xff]
    %v708 = vld [vmem:[#allocation2 + $0x198] sm:$0xff]
    %v709 = vld [vmem:[#allocation2 + $0x1a0] sm:$0xff]
    %v710 = vld [vmem:[#allocation2 + $0x1a8] sm:$0xff]
    %v711 = vld [vmem:[#allocation2 + $0x1b0] sm:$0xff]
    %v712 = vld [vmem:[#allocation2 + $0x1b8] sm:$0xff]
    %v713 = vld [vmem:[#allocation2 + $0x1c0] sm:$0xff]
    %v714 = vld [vmem:[#allocation2 + $0x1c8] sm:$0xff]
    %v715 = vld [vmem:[#allocation2 + $0x1d0] sm:$0xff]
    %v716 = vld [vmem:[#allocation2 + $0x1d8] sm:$0xff]
    %v717 = vld [vmem:[#allocation2 + $0x1e0] sm:$0xff]
    %v718 = vld [vmem:[#allocation2 + $0x1e8] sm:$0xff]
    %v719 = vld [vmem:[#allocation2 + $0x1f0] sm:$0xff]
    %v720 = vld [vmem:[#allocation2 + $0x1f8] sm:$0xff]
    %v721 = vld [vmem:[%s4] sm:$0x3]
    %v723 = vlaneseq
    %v724 = vshrl.u32 %v723, 7
    %v725 = vsub.s32 0, %v724
    %v726 = vrot.slane %v721, %v725
    %v727 = vlaneseq
    %v728 = vshrl.u32 %v727, 7
    %v729 = vsub.s32 1, %v728
    %v730 = vrot.slane %v721, %v729
    %v797 = vunpack.c.l.b16 %v657
    %v798 = vunpack.c.h.b16 %v657
    %v799 = vunpack.c.l.b16 %v658
    %v800 = vunpack.c.h.b16 %v658
    %v801 = vunpack.c.l.b16 %v659
    %v802 = vunpack.c.h.b16 %v659
    %v803 = vunpack.c.l.b16 %v660
    %v804 = vunpack.c.h.b16 %v660
    %v805 = vunpack.c.l.b16 %v661
    %v806 = vunpack.c.h.b16 %v661
    %v807 = vunpack.c.l.b16 %v662
    %v808 = vunpack.c.h.b16 %v662
    %v809 = vunpack.c.l.b16 %v663
    %v810 = vunpack.c.h.b16 %v663
    %v811 = vunpack.c.l.b16 %v664
    %v812 = vunpack.c.h.b16 %v664
    %v813 = vunpack.c.l.b16 %v665
    %v814 = vunpack.c.h.b16 %v665
    %v815 = vunpack.c.l.b16 %v666
    %v816 = vunpack.c.h.b16 %v666
    %v817 = vunpack.c.l.b16 %v667
    %v818 = vunpack.c.h.b16 %v667
    %v819 = vunpack.c.l.b16 %v668
    %v820 = vunpack.c.h.b16 %v668
    %v821 = vunpack.c.l.b16 %v669
    %v822 = vunpack.c.h.b16 %v669
    %v823 = vunpack.c.l.b16 %v670
    %v824 = vunpack.c.h.b16 %v670
    %v825 = vunpack.c.l.b16 %v671
    %v826 = vunpack.c.h.b16 %v671
    %v827 = vunpack.c.l.b16 %v672
    %v828 = vunpack.c.h.b16 %v672
    %v829 = vunpack.c.l.b16 %v673
    %v830 = vunpack.c.h.b16 %v673
    %v831 = vunpack.c.l.b16 %v674
    %v832 = vunpack.c.h.b16 %v674
    %v833 = vunpack.c.l.b16 %v675
    %v834 = vunpack.c.h.b16 %v675
    %v835 = vunpack.c.l.b16 %v676
    %v836 = vunpack.c.h.b16 %v676
    %v837 = vunpack.c.l.b16 %v677
    %v838 = vunpack.c.h.b16 %v677
    %v839 = vunpack.c.l.b16 %v678
    %v840 = vunpack.c.h.b16 %v678
    %v841 = vunpack.c.l.b16 %v679
    %v842 = vunpack.c.h.b16 %v679
    %v843 = vunpack.c.l.b16 %v680
    %v844 = vunpack.c.h.b16 %v680
    %v845 = vunpack.c.l.b16 %v681
    %v846 = vunpack.c.h.b16 %v681
    %v847 = vunpack.c.l.b16 %v682
    %v848 = vunpack.c.h.b16 %v682
    %v849 = vunpack.c.l.b16 %v683
    %v850 = vunpack.c.h.b16 %v683
    %v851 = vunpack.c.l.b16 %v684
    %v852 = vunpack.c.h.b16 %v684
    %v853 = vunpack.c.l.b16 %v685
    %v854 = vunpack.c.h.b16 %v685
    %v855 = vunpack.c.l.b16 %v686
    %v856 = vunpack.c.h.b16 %v686
    %v857 = vunpack.c.l.b16 %v687
    %v858 = vunpack.c.h.b16 %v687
    %v859 = vunpack.c.l.b16 %v688
    %v860 = vunpack.c.h.b16 %v688
    %v861 = vunpack.c.l.b16 %v689
    %v862 = vunpack.c.h.b16 %v689
    %v863 = vunpack.c.l.b16 %v690
    %v864 = vunpack.c.h.b16 %v690
    %v865 = vunpack.c.l.b16 %v691
    %v866 = vunpack.c.h.b16 %v691
    %v867 = vunpack.c.l.b16 %v692
    %v868 = vunpack.c.h.b16 %v692
    %v869 = vunpack.c.l.b16 %v693
    %v870 = vunpack.c.h.b16 %v693
    %v871 = vunpack.c.l.b16 %v694
    %v872 = vunpack.c.h.b16 %v694
    %v873 = vunpack.c.l.b16 %v695
    %v874 = vunpack.c.h.b16 %v695
    %v875 = vunpack.c.l.b16 %v696
    %v876 = vunpack.c.h.b16 %v696
    %v877 = vunpack.c.l.b16 %v697
    %v878 = vunpack.c.h.b16 %v697
    %v879 = vunpack.c.l.b16 %v698
    %v880 = vunpack.c.h.b16 %v698
    %v881 = vunpack.c.l.b16 %v699
    %v882 = vunpack.c.h.b16 %v699
    %v883 = vunpack.c.l.b16 %v700
    %v884 = vunpack.c.h.b16 %v700
    %v885 = vunpack.c.l.b16 %v701
    %v886 = vunpack.c.h.b16 %v701
    %v887 = vunpack.c.l.b16 %v702
    %v888 = vunpack.c.h.b16 %v702
    %v889 = vunpack.c.l.b16 %v703
    %v890 = vunpack.c.h.b16 %v703
    %v891 = vunpack.c.l.b16 %v704
    %v892 = vunpack.c.h.b16 %v704
    %v893 = vunpack.c.l.b16 %v705
    %v894 = vunpack.c.h.b16 %v705
    %v895 = vunpack.c.l.b16 %v706
    %v896 = vunpack.c.h.b16 %v706
    %v897 = vunpack.c.l.b16 %v707
    %v898 = vunpack.c.h.b16 %v707
    %v899 = vunpack.c.l.b16 %v708
    %v900 = vunpack.c.h.b16 %v708
    %v901 = vunpack.c.l.b16 %v709
    %v902 = vunpack.c.h.b16 %v709
    %v903 = vunpack.c.l.b16 %v710
    %v904 = vunpack.c.h.b16 %v710
    %v905 = vunpack.c.l.b16 %v711
    %v906 = vunpack.c.h.b16 %v711
    %v907 = vunpack.c.l.b16 %v712
    %v908 = vunpack.c.h.b16 %v712
    %v909 = vunpack.c.l.b16 %v713
    %v910 = vunpack.c.h.b16 %v713
    %v911 = vunpack.c.l.b16 %v714
    %v912 = vunpack.c.h.b16 %v714
    %v913 = vunpack.c.l.b16 %v715
    %v914 = vunpack.c.h.b16 %v715
    %v915 = vunpack.c.l.b16 %v716
    %v916 = vunpack.c.h.b16 %v716
    %v917 = vunpack.c.l.b16 %v717
    %v918 = vunpack.c.h.b16 %v717
    %v919 = vunpack.c.l.b16 %v718
    %v920 = vunpack.c.h.b16 %v718
    %v921 = vunpack.c.l.b16 %v719
    %v922 = vunpack.c.h.b16 %v719
    %v923 = vunpack.c.l.b16 %v720
    %v924 = vunpack.c.h.b16 %v720
    %v925 = vpack.c.b16 %v799, %v797
    %v926 = vpack.c.b16 %v800, %v798
    %v927 = vpack.c.b16 %v803, %v801
    %v928 = vpack.c.b16 %v804, %v802
    %v929 = vpack.c.b16 %v807, %v805
    %v930 = vpack.c.b16 %v808, %v806
    %v931 = vpack.c.b16 %v811, %v809
    %v932 = vpack.c.b16 %v812, %v810
    %v933 = vpack.c.b16 %v815, %v813
    %v934 = vpack.c.b16 %v816, %v814
    %v935 = vpack.c.b16 %v819, %v817
    %v936 = vpack.c.b16 %v820, %v818
    %v937 = vpack.c.b16 %v823, %v821
    %v938 = vpack.c.b16 %v824, %v822
    %v939 = vpack.c.b16 %v827, %v825
    %v940 = vpack.c.b16 %v828, %v826
    %v941 = vpack.c.b16 %v831, %v829
    %v942 = vpack.c.b16 %v832, %v830
    %v943 = vpack.c.b16 %v835, %v833
    %v944 = vpack.c.b16 %v836, %v834
    %v945 = vpack.c.b16 %v839, %v837
    %v946 = vpack.c.b16 %v840, %v838
    %v947 = vpack.c.b16 %v843, %v841
    %v948 = vpack.c.b16 %v844, %v842
    %v949 = vpack.c.b16 %v847, %v845
    %v950 = vpack.c.b16 %v848, %v846
    %v951 = vpack.c.b16 %v851, %v849
    %v952 = vpack.c.b16 %v852, %v850
    %v953 = vpack.c.b16 %v855, %v853
    %v954 = vpack.c.b16 %v856, %v854
    %v955 = vpack.c.b16 %v859, %v857
    %v956 = vpack.c.b16 %v860, %v858
    %v957 = vpack.c.b16 %v863, %v861
    %v958 = vpack.c.b16 %v864, %v862
    %v959 = vpack.c.b16 %v867, %v865
    %v960 = vpack.c.b16 %v868, %v866
    %v961 = vpack.c.b16 %v871, %v869
    %v962 = vpack.c.b16 %v872, %v870
    %v963 = vpack.c.b16 %v875, %v873
    %v964 = vpack.c.b16 %v876, %v874
    %v965 = vpack.c.b16 %v879, %v877
    %v966 = vpack.c.b16 %v880, %v878
    %v967 = vpack.c.b16 %v883, %v881
    %v968 = vpack.c.b16 %v884, %v882
    %v969 = vpack.c.b16 %v887, %v885
    %v970 = vpack.c.b16 %v888, %v886
    %v971 = vpack.c.b16 %v891, %v889
    %v972 = vpack.c.b16 %v892, %v890
    %v973 = vpack.c.b16 %v895, %v893
    %v974 = vpack.c.b16 %v896, %v894
    %v975 = vpack.c.b16 %v899, %v897
    %v976 = vpack.c.b16 %v900, %v898
    %v977 = vpack.c.b16 %v903, %v901
    %v978 = vpack.c.b16 %v904, %v902
    %v979 = vpack.c.b16 %v907, %v905
    %v980 = vpack.c.b16 %v908, %v906
    %v981 = vpack.c.b16 %v911, %v909
    %v982 = vpack.c.b16 %v912, %v910
    %v983 = vpack.c.b16 %v915, %v913
    %v984 = vpack.c.b16 %v916, %v914
    %v985 = vpack.c.b16 %v919, %v917
    %v986 = vpack.c.b16 %v920, %v918
    %v987 = vpack.c.b16 %v923, %v921
    %v988 = vpack.c.b16 %v924, %v922
    %1053 = vmatprep.subr.bf16.mxu0 %v940
    %1054 = vmatpush1.bf16.msra.mxu0 %v939
    %1055 = vmatprep.subr.bf16.mxu0 %v938
    %1056 = vmatpush1.bf16.msra.mxu0 %v937
    %1057 = vmatprep.subr.bf16.mxu0 %v936
    %1058 = vmatpush1.bf16.msra.mxu0 %v935
    %1059 = vmatprep.subr.bf16.mxu0 %v934
    %1060 = vmatpush1.bf16.msra.mxu0 %v933
    %1061 = vmatprep.subr.bf16.mxu0 %v932
    %1062 = vmatpush1.bf16.msra.mxu0 %v931
    %1063 = vmatprep.subr.bf16.mxu0 %v930
    %1064 = vmatpush1.bf16.msra.mxu0 %v929
    %1065 = vmatprep.subr.bf16.mxu0 %v928
    %1066 = vmatpush1.bf16.msra.mxu0 %v927
    %1067 = vmatprep.subr.bf16.mxu0 %v926
    %1068 = vmatpush1.bf16.msra.mxu0 %v925
    %1069 = vmatprep.subr.bf16.mxu0 %v956
    %1070 = vmatpush2.bf16.msra.mxu0 %v955
    %1071 = vmatprep.subr.bf16.mxu0 %v954
    %1072 = vmatpush2.bf16.msra.mxu0 %v953
    %1073 = vmatprep.subr.bf16.mxu0 %v952
    %1074 = vmatpush2.bf16.msra.mxu0 %v951
    %1075 = vmatprep.subr.bf16.mxu0 %v950
    %1076 = vmatpush2.bf16.msra.mxu0 %v949
    %1077 = vmatprep.subr.bf16.mxu0 %v948
    %1078 = vmatpush2.bf16.msra.mxu0 %v947
    %1079 = vmatprep.subr.bf16.mxu0 %v946
    %1080 = vmatpush2.bf16.msra.mxu0 %v945
    %1081 = vmatprep.subr.bf16.mxu0 %v944
    %1082 = vmatpush2.bf16.msra.mxu0 %v943
    %1083 = vmatprep.subr.bf16.mxu0 %v942
    %1084 = vmatpush2.bf16.msra.mxu0 %v941
    %1085 = vmatprep.mubr.bf16.mxu0 %v654
    %1086 = vmatmul.mubr.bf16.gmra.mxu0 %v653
    %v1087 = vpop.f32.mrf.mxu0
    %v1088 = vadd.f32 %v726, %v1087
    %v1089 = vpop.f32.mrf.mxu0
    %v1090 = vadd.f32 %v730, %v1089
    %v1091 = vpop.f32.mrf.mxu0
    %v1092 = vpop.f32.mrf.mxu0
    %1093 = vdwg.mxu0
    %1094 = vmatprep.subr.bf16.mxu0 %v972
    %1095 = vmatpush1.bf16.msra.mxu0 %v971
    %1096 = vmatprep.subr.bf16.mxu0 %v970
    %1097 = vmatpush1.bf16.msra.mxu0 %v969
    %1098 = vmatprep.subr.bf16.mxu0 %v968
    %1099 = vmatpush1.bf16.msra.mxu0 %v967
    %1100 = vmatprep.subr.bf16.mxu0 %v966
    %1101 = vmatpush1.bf16.msra.mxu0 %v965
    %1102 = vmatprep.subr.bf16.mxu0 %v964
    %1103 = vmatpush1.bf16.msra.mxu0 %v963
    %1104 = vmatprep.subr.bf16.mxu0 %v962
    %1105 = vmatpush1.bf16.msra.mxu0 %v961
    %1106 = vmatprep.subr.bf16.mxu0 %v960
    %1107 = vmatpush1.bf16.msra.mxu0 %v959
    %1108 = vmatprep.subr.bf16.mxu0 %v958
    %1109 = vmatpush1.bf16.msra.mxu0 %v957
    %1110 = vmatprep.subr.bf16.mxu0 %v988
    %1111 = vmatpush2.bf16.msra.mxu0 %v987
    %1112 = vmatprep.subr.bf16.mxu0 %v986
    %1113 = vmatpush2.bf16.msra.mxu0 %v985
    %1114 = vmatprep.subr.bf16.mxu0 %v984
    %1115 = vmatpush2.bf16.msra.mxu0 %v983
    %1116 = vmatprep.subr.bf16.mxu0 %v982
    %1117 = vmatpush2.bf16.msra.mxu0 %v981
    %1118 = vmatprep.subr.bf16.mxu0 %v980
    %1119 = vmatpush2.bf16.msra.mxu0 %v979
    %1120 = vmatprep.subr.bf16.mxu0 %v978
    %1121 = vmatpush2.bf16.msra.mxu0 %v977
    %1122 = vmatprep.subr.bf16.mxu0 %v976
    %1123 = vmatpush2.bf16.msra.mxu0 %v975
    %1124 = vmatprep.subr.bf16.mxu0 %v974
    %1125 = vmatpush2.bf16.msra.mxu0 %v973
    %1126 = vmatprep.mubr.bf16.mxu0 %v656
    %1127 = vmatmul.mubr.bf16.gmra.mxu0 %v655
    %v1128 = vpop.f32.mrf.mxu0
    %v1129 = vadd.f32 %v1088, %v1128
    %v1130 = vpop.f32.mrf.mxu0
    %v1131 = vadd.f32 %v1090, %v1130
    %v1132 = vpop.f32.mrf.mxu0
    %v1133 = vpop.f32.mrf.mxu0
    %1134 = vdwg.mxu0
    %v1135 = vmax.f32 %v1129, 0.0
    %v1136 = vmax.f32 %v1131, 0.0
    %v1137 = vpack.c.bf16 %v1135, %v1135
    %v1138 = vpack.c.bf16 %v1136, %v1136
    %v1139 = vld [vmem:[%s5] sm:$0xff]
    %v1140 = vld [vmem:[%s5 + $0x8] sm:$0xf]
    %v1141 = vld [vmem:[%s5 + $0xc] sm:$0xff]
    %v1142 = vld [vmem:[%s5 + $0x14] sm:$0xf]
    %v1143 = vld [vmem:[%s5 + $0x18] sm:$0xff]
    %v1144 = vld [vmem:[%s5 + $0x20] sm:$0xf]
    %v1145 = vld [vmem:[%s5 + $0x24] sm:$0xff]
    %v1146 = vld [vmem:[%s5 + $0x2c] sm:$0xf]
    %v1147 = vld [vmem:[%s5 + $0x30] sm:$0xff]
    %v1148 = vld [vmem:[%s5 + $0x38] sm:$0xf]
    %v1149 = vld [vmem:[%s5 + $0x3c] sm:$0xff]
    %v1150 = vld [vmem:[%s5 + $0x44] sm:$0xf]
    %v1151 = vld [vmem:[%s5 + $0x48] sm:$0xff]
    %v1152 = vld [vmem:[%s5 + $0x50] sm:$0xf]
    %v1153 = vld [vmem:[%s5 + $0x54] sm:$0xff]
    %v1154 = vld [vmem:[%s5 + $0x5c] sm:$0xf]
    %v1155 = vld [vmem:[%s5 + $0x60] sm:$0xff]
    %v1156 = vld [vmem:[%s5 + $0x68] sm:$0xf]
    %v1157 = vld [vmem:[%s5 + $0x6c] sm:$0xff]
    %v1158 = vld [vmem:[%s5 + $0x74] sm:$0xf]
    %v1159 = vld [vmem:[%s5 + $0x78] sm:$0xff]
    %v1160 = vld [vmem:[%s5 + $0x80] sm:$0xf]
    %v1161 = vld [vmem:[%s5 + $0x84] sm:$0xff]
    %v1162 = vld [vmem:[%s5 + $0x8c] sm:$0xf]
    %v1163 = vld [vmem:[%s5 + $0x90] sm:$0xff]
    %v1164 = vld [vmem:[%s5 + $0x98] sm:$0xf]
    %v1165 = vld [vmem:[%s5 + $0x9c] sm:$0xff]
    %v1166 = vld [vmem:[%s5 + $0xa4] sm:$0xf]
    %v1167 = vld [vmem:[%s5 + $0xa8] sm:$0xff]
    %v1168 = vld [vmem:[%s5 + $0xb0] sm:$0xf]
    %v1169 = vld [vmem:[%s5 + $0xb4] sm:$0xff]
    %v1170 = vld [vmem:[%s5 + $0xbc] sm:$0xf]
    %v1171 = vld [vmem:[%s5 + $0xc0] sm:$0xff]
    %v1172 = vld [vmem:[%s5 + $0xc8] sm:$0xf]
    %v1173 = vld [vmem:[%s5 + $0xcc] sm:$0xff]
    %v1174 = vld [vmem:[%s5 + $0xd4] sm:$0xf]
    %v1175 = vld [vmem:[%s5 + $0xd8] sm:$0xff]
    %v1176 = vld [vmem:[%s5 + $0xe0] sm:$0xf]
    %v1177 = vld [vmem:[%s5 + $0xe4] sm:$0xff]
    %v1178 = vld [vmem:[%s5 + $0xec] sm:$0xf]
    %v1179 = vld [vmem:[%s5 + $0xf0] sm:$0xff]
    %v1180 = vld [vmem:[%s5 + $0xf8] sm:$0xf]
    %v1181 = vld [vmem:[%s5 + $0xfc] sm:$0xff]
    %v1182 = vld [vmem:[%s5 + $0x104] sm:$0xf]
    %v1183 = vld [vmem:[%s5 + $0x108] sm:$0xff]
    %v1184 = vld [vmem:[%s5 + $0x110] sm:$0xf]
    %v1185 = vld [vmem:[%s5 + $0x114] sm:$0xff]
    %v1186 = vld [vmem:[%s5 + $0x11c] sm:$0xf]
    %v1187 = vld [vmem:[%s5 + $0x120] sm:$0xff]
    %v1188 = vld [vmem:[%s5 + $0x128] sm:$0xf]
    %v1189 = vld [vmem:[%s5 + $0x12c] sm:$0xff]
    %v1190 = vld [vmem:[%s5 + $0x134] sm:$0xf]
    %v1191 = vld [vmem:[%s5 + $0x138] sm:$0xff]
    %v1192 = vld [vmem:[%s5 + $0x140] sm:$0xf]
    %v1193 = vld [vmem:[%s5 + $0x144] sm:$0xff]
    %v1194 = vld [vmem:[%s5 + $0x14c] sm:$0xf]
    %v1195 = vld [vmem:[%s5 + $0x150] sm:$0xff]
    %v1196 = vld [vmem:[%s5 + $0x158] sm:$0xf]
    %v1197 = vld [vmem:[%s5 + $0x15c] sm:$0xff]
    %v1198 = vld [vmem:[%s5 + $0x164] sm:$0xf]
    %v1199 = vld [vmem:[%s5 + $0x168] sm:$0xff]
    %v1200 = vld [vmem:[%s5 + $0x170] sm:$0xf]
    %v1201 = vld [vmem:[%s5 + $0x174] sm:$0xff]
    %v1202 = vld [vmem:[%s5 + $0x17c] sm:$0xf]
    %v1203 = vld [vmem:[%s6] sm:$0x7]
    %v1205 = vlaneseq
    %v1206 = vshrl.u32 %v1205, 7
    %v1207 = vsub.s32 0, %v1206
    %v1208 = vrot.slane %v1203, %v1207
    %v1209 = vlaneseq
    %v1210 = vshrl.u32 %v1209, 7
    %v1211 = vsub.s32 1, %v1210
    %v1212 = vrot.slane %v1203, %v1211
    %v1213 = vlaneseq
    %v1214 = vshrl.u32 %v1213, 7
    %v1215 = vsub.s32 2, %v1214
    %v1216 = vrot.slane %v1203, %v1215
    %v1284 = vunpack.c.l.b16 %v1139
    %v1285 = vunpack.c.h.b16 %v1139
    %v1286 = vunpack.c.l.b16 %v1140
    %v1287 = vunpack.c.l.b16 %v1141
    %v1288 = vunpack.c.h.b16 %v1141
    %v1289 = vunpack.c.l.b16 %v1142
    %v1290 = vunpack.c.l.b16 %v1143
    %v1291 = vunpack.c.h.b16 %v1143
    %v1292 = vunpack.c.l.b16 %v1144
    %v1293 = vunpack.c.l.b16 %v1145
    %v1294 = vunpack.c.h.b16 %v1145
    %v1295 = vunpack.c.l.b16 %v1146
    %v1296 = vunpack.c.l.b16 %v1147
    %v1297 = vunpack.c.h.b16 %v1147
    %v1298 = vunpack.c.l.b16 %v1148
    %v1299 = vunpack.c.l.b16 %v1149
    %v1300 = vunpack.c.h.b16 %v1149
    %v1301 = vunpack.c.l.b16 %v1150
    %v1302 = vunpack.c.l.b16 %v1151
    %v1303 = vunpack.c.h.b16 %v1151
    %v1304 = vunpack.c.l.b16 %v1152
    %v1305 = vunpack.c.l.b16 %v1153
    %v1306 = vunpack.c.h.b16 %v1153
    %v1307 = vunpack.c.l.b16 %v1154
    %v1308 = vunpack.c.l.b16 %v1155
    %v1309 = vunpack.c.h.b16 %v1155
    %v1310 = vunpack.c.l.b16 %v1156
    %v1311 = vunpack.c.l.b16 %v1157
    %v1312 = vunpack.c.h.b16 %v1157
    %v1313 = vunpack.c.l.b16 %v1158
    %v1314 = vunpack.c.l.b16 %v1159
    %v1315 = vunpack.c.h.b16 %v1159
    %v1316 = vunpack.c.l.b16 %v1160
    %v1317 = vunpack.c.l.b16 %v1161
    %v1318 = vunpack.c.h.b16 %v1161
    %v1319 = vunpack.c.l.b16 %v1162
    %v1320 = vunpack.c.l.b16 %v1163
    %v1321 = vunpack.c.h.b16 %v1163
    %v1322 = vunpack.c.l.b16 %v1164
    %v1323 = vunpack.c.l.b16 %v1165
    %v1324 = vunpack.c.h.b16 %v1165
    %v1325 = vunpack.c.l.b16 %v1166
    %v1326 = vunpack.c.l.b16 %v1167
    %v1327 = vunpack.c.h.b16 %v1167
    %v1328 = vunpack.c.l.b16 %v1168
    %v1329 = vunpack.c.l.b16 %v1169
    %v1330 = vunpack.c.h.b16 %v1169
    %v1331 = vunpack.c.l.b16 %v1170
    %v1332 = vunpack.c.l.b16 %v1171
    %v1333 = vunpack.c.h.b16 %v1171
    %v1334 = vunpack.c.l.b16 %v1172
    %v1335 = vunpack.c.l.b16 %v1173
    %v1336 = vunpack.c.h.b16 %v1173
    %v1337 = vunpack.c.l.b16 %v1174
    %v1338 = vunpack.c.l.b16 %v1175
    %v1339 = vunpack.c.h.b16 %v1175
    %v1340 = vunpack.c.l.b16 %v1176
    %v1341 = vunpack.c.l.b16 %v1177
    %v1342 = vunpack.c.h.b16 %v1177
    %v1343 = vunpack.c.l.b16 %v1178
    %v1344 = vunpack.c.l.b16 %v1179
    %v1345 = vunpack.c.h.b16 %v1179
    %v1346 = vunpack.c.l.b16 %v1180
    %v1347 = vunpack.c.l.b16 %v1181
    %v1348 = vunpack.c.h.b16 %v1181
    %v1349 = vunpack.c.l.b16 %v1182
    %v1350 = vunpack.c.l.b16 %v1183
    %v1351 = vunpack.c.h.b16 %v1183
    %v1352 = vunpack.c.l.b16 %v1184
    %v1353 = vunpack.c.l.b16 %v1185
    %v1354 = vunpack.c.h.b16 %v1185
    %v1355 = vunpack.c.l.b16 %v1186
    %v1356 = vunpack.c.l.b16 %v1187
    %v1357 = vunpack.c.h.b16 %v1187
    %v1358 = vunpack.c.l.b16 %v1188
    %v1359 = vunpack.c.l.b16 %v1189
    %v1360 = vunpack.c.h.b16 %v1189
    %v1361 = vunpack.c.l.b16 %v1190
    %v1362 = vunpack.c.l.b16 %v1191
    %v1363 = vunpack.c.h.b16 %v1191
    %v1364 = vunpack.c.l.b16 %v1192
    %v1365 = vunpack.c.l.b16 %v1193
    %v1366 = vunpack.c.h.b16 %v1193
    %v1367 = vunpack.c.l.b16 %v1194
    %v1368 = vunpack.c.l.b16 %v1195
    %v1369 = vunpack.c.h.b16 %v1195
    %v1370 = vunpack.c.l.b16 %v1196
    %v1371 = vunpack.c.l.b16 %v1197
    %v1372 = vunpack.c.h.b16 %v1197
    %v1373 = vunpack.c.l.b16 %v1198
    %v1374 = vunpack.c.l.b16 %v1199
    %v1375 = vunpack.c.h.b16 %v1199
    %v1376 = vunpack.c.l.b16 %v1200
    %v1377 = vunpack.c.l.b16 %v1201
    %v1378 = vunpack.c.h.b16 %v1201
    %v1379 = vunpack.c.l.b16 %v1202
    %v1380 = vpack.c.b16 %v1287, %v1284
    %v1381 = vpack.c.b16 %v1288, %v1285
    %v1382 = vpack.c.b16 %v1289, %v1286
    %v1383 = vpack.c.b16 %v1293, %v1290
    %v1384 = vpack.c.b16 %v1294, %v1291
    %v1385 = vpack.c.b16 %v1295, %v1292
    %v1386 = vpack.c.b16 %v1299, %v1296
    %v1387 = vpack.c.b16 %v1300, %v1297
    %v1388 = vpack.c.b16 %v1301, %v1298
    %v1389 = vpack.c.b16 %v1305, %v1302
    %v1390 = vpack.c.b16 %v1306, %v1303
    %v1391 = vpack.c.b16 %v1307, %v1304
    %v1392 = vpack.c.b16 %v1311, %v1308
    %v1393 = vpack.c.b16 %v1312, %v1309
    %v1394 = vpack.c.b16 %v1313, %v1310
    %v1395 = vpack.c.b16 %v1317, %v1314
    %v1396 = vpack.c.b16 %v1318, %v1315
    %v1397 = vpack.c.b16 %v1319, %v1316
    %v1398 = vpack.c.b16 %v1323, %v1320
    %v1399 = vpack.c.b16 %v1324, %v1321
    %v1400 = vpack.c.b16 %v1325, %v1322
    %v1401 = vpack.c.b16 %v1329, %v1326
    %v1402 = vpack.c.b16 %v1330, %v1327
    %v1403 = vpack.c.b16 %v1331, %v1328
    %v1404 = vpack.c.b16 %v1335, %v1332
    %v1405 = vpack.c.b16 %v1336, %v1333
    %v1406 = vpack.c.b16 %v1337, %v1334
    %v1407 = vpack.c.b16 %v1341, %v1338
    %v1408 = vpack.c.b16 %v1342, %v1339
    %v1409 = vpack.c.b16 %v1343, %v1340
    %v1410 = vpack.c.b16 %v1347, %v1344
    %v1411 = vpack.c.b16 %v1348, %v1345
    %v1412 = vpack.c.b16 %v1349, %v1346
    %v1413 = vpack.c.b16 %v1353, %v1350
    %v1414 = vpack.c.b16 %v1354, %v1351
    %v1415 = vpack.c.b16 %v1355, %v1352
    %v1416 = vpack.c.b16 %v1359, %v1356
    %v1417 = vpack.c.b16 %v1360, %v1357
    %v1418 = vpack.c.b16 %v1361, %v1358
    %v1419 = vpack.c.b16 %v1365, %v1362
    %v1420 = vpack.c.b16 %v1366, %v1363
    %v1421 = vpack.c.b16 %v1367, %v1364
    %v1422 = vpack.c.b16 %v1371, %v1368
    %v1423 = vpack.c.b16 %v1372, %v1369
    %v1424 = vpack.c.b16 %v1373, %v1370
    %v1425 = vpack.c.b16 %v1377, %v1374
    %v1426 = vpack.c.b16 %v1378, %v1375
    %v1427 = vpack.c.b16 %v1379, %v1376
    %1476 = vmatprep.subr.bf16.mxu0 %v1402
    %1477 = vmatpush1.bf16.msra.mxu0 %v1401
    %1478 = vmatprep.subr.bf16.mxu0 %v1399
    %1479 = vmatpush1.bf16.msra.mxu0 %v1398
    %1480 = vmatprep.subr.bf16.mxu0 %v1396
    %1481 = vmatpush1.bf16.msra.mxu0 %v1395
    %1482 = vmatprep.subr.bf16.mxu0 %v1393
    %1483 = vmatpush1.bf16.msra.mxu0 %v1392
    %1484 = vmatprep.subr.bf16.mxu0 %v1390
    %1485 = vmatpush1.bf16.msra.mxu0 %v1389
    %1486 = vmatprep.subr.bf16.mxu0 %v1387
    %1487 = vmatpush1.bf16.msra.mxu0 %v1386
    %1488 = vmatprep.subr.bf16.mxu0 %v1384
    %1489 = vmatpush1.bf16.msra.mxu0 %v1383
    %1490 = vmatprep.subr.bf16.mxu0 %v1381
    %1491 = vmatpush1.bf16.msra.mxu0 %v1380
    %1492 = vmatprep.subr.bf16.mxu0 %v1426
    %1493 = vmatpush2.bf16.msra.mxu0 %v1425
    %1494 = vmatprep.subr.bf16.mxu0 %v1423
    %1495 = vmatpush2.bf16.msra.mxu0 %v1422
    %1496 = vmatprep.subr.bf16.mxu0 %v1420
    %1497 = vmatpush2.bf16.msra.mxu0 %v1419
    %1498 = vmatprep.subr.bf16.mxu0 %v1417
    %1499 = vmatpush2.bf16.msra.mxu0 %v1416
    %1500 = vmatprep.subr.bf16.mxu0 %v1414
    %1501 = vmatpush2.bf16.msra.mxu0 %v1413
    %1502 = vmatprep.subr.bf16.mxu0 %v1411
    %1503 = vmatpush2.bf16.msra.mxu0 %v1410
    %1504 = vmatprep.subr.bf16.mxu0 %v1408
    %1505 = vmatpush2.bf16.msra.mxu0 %v1407
    %1506 = vmatprep.subr.bf16.mxu0 %v1405
    %1507 = vmatpush2.bf16.msra.mxu0 %v1404
    %1508 = vmatprep.mubr.bf16.mxu0 %v1138
    %1509 = vmatmul.mubr.bf16.gmra.mxu0 %v1137
    %v1510 = vpop.f32.mrf.mxu0
    %v1511 = vadd.f32 %v1208, %v1510
    %v1512 = vpop.f32.mrf.mxu0
    %v1513 = vadd.f32 %v1212, %v1512
    %v1514 = vpop.f32.mrf.mxu0
    %v1515 = vpop.f32.mrf.mxu0
    %1516 = vdwg.mxu0
    %1517 = vmatprep.subr.bf16.mxu0 0
    %1518 = vmatpush1.bf16.msra.mxu0 %v1403
    %1519 = vmatprep.subr.bf16.mxu0 0
    %1520 = vmatpush1.bf16.msra.mxu0 %v1400
    %1521 = vmatprep.subr.bf16.mxu0 0
    %1522 = vmatpush1.bf16.msra.mxu0 %v1397
    %1523 = vmatprep.subr.bf16.mxu0 0
    %1524 = vmatpush1.bf16.msra.mxu0 %v1394
    %1525 = vmatprep.subr.bf16.mxu0 0
    %1526 = vmatpush1.bf16.msra.mxu0 %v1391
    %1527 = vmatprep.subr.bf16.mxu0 0
    %1528 = vmatpush1.bf16.msra.mxu0 %v1388
    %1529 = vmatprep.subr.bf16.mxu0 0
    %1530 = vmatpush1.bf16.msra.mxu0 %v1385
    %1531 = vmatprep.subr.bf16.mxu0 0
    %1532 = vmatpush1.bf16.msra.mxu0 %v1382
    %1533 = vmatprep.subr.bf16.mxu0 0
    %1534 = vmatpush2.bf16.msra.mxu0 %v1427
    %1535 = vmatprep.subr.bf16.mxu0 0
    %1536 = vmatpush2.bf16.msra.mxu0 %v1424
    %1537 = vmatprep.subr.bf16.mxu0 0
    %1538 = vmatpush2.bf16.msra.mxu0 %v1421
    %1539 = vmatprep.subr.bf16.mxu0 0
    %1540 = vmatpush2.bf16.msra.mxu0 %v1418
    %1541 = vmatprep.subr.bf16.mxu0 0
    %1542 = vmatpush2.bf16.msra.mxu0 %v1415
    %1543 = vmatprep.subr.bf16.mxu0 0
    %1544 = vmatpush2.bf16.msra.mxu0 %v1412
    %1545 = vmatprep.subr.bf16.mxu0 0
    %1546 = vmatpush2.bf16.msra.mxu0 %v1409
    %1547 = vmatprep.subr.bf16.mxu0 0
    %1548 = vmatpush2.bf16.msra.mxu0 %v1406
    %1549 = vmatprep.mubr.bf16.mxu0 %v1138
    %1550 = vmatmul.mubr.bf16.gmra.mxu0 %v1137
    %v1551 = vpop.f32.mrf.mxu0
    %v1552 = vadd.f32 %v1216, %v1551
    %v1553 = vpop.f32.mrf.mxu0
    %v1554 = vpop.f32.mrf.mxu0
    %v1555 = vpop.f32.mrf.mxu0
    %1556 = vdwg.mxu0
    %1557 = vst [vmem:[#allocation5] sm:$0xff] %v1511
    %1558 = vst [vmem:[#allocation5 + $0x8] sm:$0xff] %v1513
    %1559 = vst.msk [vmem:[#allocation5 + $0x10] sm:$0xff] %vm466, %v1552
    // Predicated region
    $region34: #{tpu_custom_call.1} parent=1 // pred_check
      _
    $region35: #{tpu_custom_call.1} parent=1 // pred_check_branch
      %1561 = sbr.rel (0) target = $region37
    $region36: #{tpu_custom_call.1} parent=1 // pred_region
      %s1563 = ssub.s32 384, 384
      %1564 = vsyncadd [#allocation4], %s1563
      %s1566 = sshll.u32 [#allocation5], 4
      %s1567 = int_to_ptr.vmem [resolvable:$true] %s1566
      %1569 = dma.vmem_to_hbm [thread:$0]  %s1567, 384, %s7, [#allocation4]
    $region37: #{tpu_custom_call.1} parent=1 // pred_fallthru
      _
    // Predicated region
    $region38: #{tpu_custom_call.1} parent=1 // pred_check
      _
    $region39: #{tpu_custom_call.1} parent=1 // pred_check_branch
      %1571 = sbr.rel (0) target = $region41
    $region40: #{tpu_custom_call.1} parent=1 // pred_region
      %1572 = dma.done [#allocation4], 384
    $region41: #{tpu_custom_call.1} parent=1 // pred_fallthru
      _
    %1573 = vsyncpa [#allocation3], 1
    %1574 = vsyncpa [#allocation4], 1

</llo_original>
